<compile_context>
chip_gen: v7x
topology: tpu7x:2x2x1
jax: 0.10.0
libtpu: 0.0.40
codegen_flags: <defaults>
</compile_context>

<pallas_src>
import jax
import jax.numpy as jnp
from jax.experimental import pallas as pl
from jax.experimental.pallas import tpu as pltpu

HIDDEN = 128
ROW_ALIGN = 16  # bf16 sublane packing: 16 rows per vreg


def _cdiv(a, b):
    return -(-a // b)


def _round_up(n, m):
    return _cdiv(n, m) * m


def _pick_tile(B, tm_cap, min_tiles=2):
    """Batch tile: <= tm_cap rows, multiple of ROW_ALIGN, >=2 tiles when the
    batch is big enough so v7x's two TensorCores both get work."""
    n = max(1, _cdiv(B, tm_cap))
    if n < min_tiles and B > ROW_ALIGN:
        n = min_tiles
    return _round_up(_cdiv(B, n), ROW_ALIGN)


def _discriminator_kernel(xin_ref, w1_ref, b1_ref, w2_ref, b2_ref, out_ref):
    # Layer 1: single bf16 MXU dot with f32 accumulation (the torch.cat is
    # done once in the wrapper so only one dot hits the saturated MXU slot).
    h = jnp.dot(xin_ref[...], w1_ref[...], preferred_element_type=jnp.float32)
    h = jnp.maximum(h + b1_ref[...], 0.0)
    # Layer 2 (128 -> 1): VPU multiply + XLU lane reduction (NOT an MXU
    # matmul -- that would add TM/16 more pushes on the binding unit).
    logit = jnp.sum(h * w2_ref[...], axis=-1, keepdims=True) + b2_ref[0]
    out_ref[...] = jax.nn.sigmoid(logit)


def discriminator_forward(theta, x, params, *, tm_cap=8192):
    """theta: (B, theta_dim), x: (B, x_dim) -> (B, 1) probabilities."""
    w1, b1, w2, b2 = params
    B = theta.shape[0]
    D = theta.shape[1] + x.shape[1]

    # Fused concat (tiny XLA op) + bf16 cast of the MXU operands.
    xin = jnp.concatenate(
        [theta.astype(jnp.float32), x.astype(jnp.float32)], axis=1
    ).astype(jnp.bfloat16)
    w1_bf = w1.astype(jnp.bfloat16)

    TM = _pick_tile(B, tm_cap)
    Bp = _round_up(B, TM)
    if Bp != B:
        xin = jnp.pad(xin, ((0, Bp - B), (0, 0)))

    out = pl.pallas_call(
        _discriminator_kernel,
        out_shape=jax.ShapeDtypeStruct((Bp, 1), jnp.float32),
        grid_spec=pltpu.PrefetchScalarGridSpec(
            num_scalar_prefetch=0,
            grid=(Bp // TM,),
            in_specs=[
                pl.BlockSpec((TM, D), lambda i: (i, 0)),        # input tile (bf16)
                pl.BlockSpec((D, HIDDEN), lambda i: (0, 0)),    # w1 (bf16, resident)
                pl.BlockSpec((1, HIDDEN), lambda i: (0, 0)),    # b1 (f32, resident)
                pl.BlockSpec((1, HIDDEN), lambda i: (0, 0)),    # w2 lane-dense (f32)
                pl.BlockSpec(memory_space=pltpu.MemorySpace.SMEM),  # b2 scalar
            ],
            out_specs=pl.BlockSpec((TM, 1), lambda i: (i, 0)),
        ),
        compiler_params=pltpu.CompilerParams(
            dimension_semantics=("parallel",)),
    )(xin, w1_bf, b1, w2, b2)
    return out[:B]


def init_params(theta_dim, x_dim, key, hidden=HIDDEN):
    """PyTorch-style uniform(-1/sqrt(fan_in), 1/sqrt(fan_in)) init.

    Layout: w1 (theta_dim + x_dim, hidden); b1 (1, hidden); w2 lane-dense
    (1, hidden); b2 (1,) scalar.
    """
    in_dim = theta_dim + x_dim
    k1, k2, k3, k4 = jax.random.split(key, 4)
    s1 = 1.0 / jnp.sqrt(jnp.float32(in_dim))
    s2 = 1.0 / jnp.sqrt(jnp.float32(hidden))
    w1 = jax.random.uniform(k1, (in_dim, hidden), jnp.float32, -s1, s1)
    b1 = jax.random.uniform(k2, (1, hidden), jnp.float32, -s1, s1)
    w2 = jax.random.uniform(k3, (1, hidden), jnp.float32, -s2, s2)
    b2 = jax.random.uniform(k4, (1,), jnp.float32, -s2, s2)
    return (w1, b1, w2, b2)


def reference_forward(theta, x, params):
    """Pure-JAX f32 reference of the PyTorch forward."""
    w1, b1, w2, b2 = params
    xin = jnp.concatenate([theta, x], axis=1)
    h = jnp.maximum(xin @ w1 + b1, 0.0)
    return jax.nn.sigmoid(h @ w2.T + b2[0])


if __name__ == "__main__":
    key = jax.random.PRNGKey(0)
    k_theta, k_x, k_params, k_big = jax.random.split(key, 4)

    # Small shapes matching the module spec.
    batch, theta_dim, x_dim = 8, 4, 12
    theta = jax.random.normal(k_theta, (batch, theta_dim), jnp.float32)
    x = jax.random.normal(k_x, (batch, x_dim), jnp.float32)
    params = init_params(theta_dim, x_dim, k_params)

    out = jax.block_until_ready(discriminator_forward(theta, x, params))
    ref = reference_forward(theta, x, params)
    assert out.shape == (batch, 1)
    # bf16 MXU operands (f32 accumulation) vs. pure-f32 reference -> relaxed tol.
    assert jnp.allclose(out, ref, atol=2e-2, rtol=2e-2)
    assert jnp.all((out >= 0.0) & (out <= 1.0))

    # Exercise the multi-tile grid + padding path (non-multiple batch).
    kb1, kb2 = jax.random.split(k_big)
    big_b = 50
    theta_b = jax.random.normal(kb1, (big_b, theta_dim), jnp.float32)
    x_b = jax.random.normal(kb2, (big_b, x_dim), jnp.float32)
    out_b = jax.block_until_ready(
        discriminator_forward(theta_b, x_b, params, tm_cap=16))
    ref_b = reference_forward(theta_b, x_b, params)
    assert out_b.shape == (big_b, 1)
    assert jnp.allclose(out_b, ref_b, atol=2e-2, rtol=2e-2)

    print("KERNEL_OK")
</pallas_src>

<mosaic_0001>
module attributes {stable_mosaic.version = 11 : i64} {
  func.func @_discriminator_kernel(%arg0: i32, %arg1: memref<16x16xbf16, #tpu.memory_space<vmem>>, %arg2: memref<16x128xbf16, #tpu.memory_space<vmem>>, %arg3: memref<1x128xf32, #tpu.memory_space<vmem>>, %arg4: memref<1x128xf32, #tpu.memory_space<vmem>>, %arg5: memref<1xf32, #tpu.memory_space<smem>>, %arg6: memref<16x1xf32, #tpu.memory_space<vmem>>) attributes {dimension_semantics = [#tpu.dimension_semantics<parallel>], iteration_bounds = array<i64: 1>, scalar_prefetch = 0 : i64, scratch_operands = 0 : i64, tpu.core_type = #tpu.core_type<tc>, window_params = [{transform_indices = @transform_0, window_bounds = array<i64: 16, 16>}, {pipeline_mode = #tpu.pipeline_mode<synchronous>, transform_indices = @transform_1, window_bounds = array<i64: 16, 128>}, {pipeline_mode = #tpu.pipeline_mode<synchronous>, transform_indices = @transform_2, window_bounds = array<i64: 1, 128>}, {pipeline_mode = #tpu.pipeline_mode<synchronous>, transform_indices = @transform_3, window_bounds = array<i64: 1, 128>}, {transform_indices = @transform_4, window_bounds = array<i64: 1>}, {transform_indices = @transform_5, window_bounds = array<i64: 16, 1>}]} {
    %c0 = arith.constant 0 : index
    %c0_0 = arith.constant 0 : index
    %0 = vector.load %arg1[%c0, %c0_0] : memref<16x16xbf16, #tpu.memory_space<vmem>>, vector<16x16xbf16>
    %c0_1 = arith.constant 0 : index
    %c0_2 = arith.constant 0 : index
    %1 = vector.load %arg2[%c0_1, %c0_2] : memref<16x128xbf16, #tpu.memory_space<vmem>>, vector<16x128xbf16>
    %cst = arith.constant dense<0.000000e+00> : vector<16x128xf32>
    %2 = tpu.matmul %0, %1, %cst {dimension_numbers = #tpu.dot_dimension_numbers<[1], [0], [0], [1], [0, 0, 1, 1], [], []>} : vector<16x16xbf16>, vector<16x128xbf16>, vector<16x128xf32> -> vector<16x128xf32>
    %c0_3 = arith.constant 0 : index
    %c0_4 = arith.constant 0 : index
    %3 = vector.load %arg3[%c0_3, %c0_4] : memref<1x128xf32, #tpu.memory_space<vmem>>, vector<1x128xf32>
    %4 = vector.broadcast %3 : vector<1x128xf32> to vector<16x128xf32>
    %5 = arith.addf %2, %4 : vector<16x128xf32>
    %cst_5 = arith.constant 0.000000e+00 : f32
    %6 = vector.broadcast %cst_5 : f32 to vector<16x128xf32>
    %7 = arith.maximumf %5, %6 : vector<16x128xf32>
    %c0_6 = arith.constant 0 : index
    %c0_7 = arith.constant 0 : index
    %8 = vector.load %arg4[%c0_6, %c0_7] : memref<1x128xf32, #tpu.memory_space<vmem>>, vector<1x128xf32>
    %9 = vector.broadcast %8 : vector<1x128xf32> to vector<16x128xf32>
    %10 = arith.mulf %7, %9 : vector<16x128xf32>
    %cst_8 = arith.constant dense<0.000000e+00> : vector<16xf32>
    %11 = vector.multi_reduction <add>, %10, %cst_8 [1] : vector<16x128xf32> to vector<16xf32>
    %12 = vector.shape_cast %11 : vector<16xf32> to vector<16x1xf32>
    %c0_9 = arith.constant 0 : index
    %13 = memref.load %arg5[%c0_9] : memref<1xf32, #tpu.memory_space<smem>>
    %14 = vector.broadcast %13 : f32 to vector<16x1xf32>
    %15 = arith.addf %12, %14 : vector<16x1xf32>
    %16 = arith.negf %15 : vector<16x1xf32>
    %17 = math.exp %16 : vector<16x1xf32>
    %cst_10 = arith.constant 1.000000e+00 : f32
    %18 = vector.broadcast %cst_10 : f32 to vector<16x1xf32>
    %19 = arith.addf %18, %17 : vector<16x1xf32>
    %20 = arith.divf %18, %19 : vector<16x1xf32>
    %c0_11 = arith.constant 0 : index
    %c0_12 = arith.constant 0 : index
    %21 = vector.load %arg6[%c0_11, %c0_12] : memref<16x1xf32, #tpu.memory_space<vmem>>, vector<16x1xf32>
    tpu.vector_store %arg6[%c0_11, %c0_12], %20 {strides = array<i32>} : memref<16x1xf32, #tpu.memory_space<vmem>>, vector<16x1xf32>,
    return
  }
  func.func @transform_0(%arg0: i32) -> (i32, i32) {
    %c0_i32 = arith.constant 0 : i32
    %c0_i32_0 = arith.constant 0 : i32
    return %arg0, %c0_i32 : i32, i32
  }
  func.func @transform_1(%arg0: i32) -> (i32, i32) {
    %c0_i32 = arith.constant 0 : i32
    %c0_i32_0 = arith.constant 0 : i32
    %c0_i32_1 = arith.constant 0 : i32
    return %c0_i32, %c0_i32_0 : i32, i32
  }
  func.func @transform_2(%arg0: i32) -> (i32, i32) {
    %c0_i32 = arith.constant 0 : i32
    %c0_i32_0 = arith.constant 0 : i32
    %c0_i32_1 = arith.constant 0 : i32
    return %c0_i32, %c0_i32_0 : i32, i32
  }
  func.func @transform_3(%arg0: i32) -> (i32, i32) {
    %c0_i32 = arith.constant 0 : i32
    %c0_i32_0 = arith.constant 0 : i32
    %c0_i32_1 = arith.constant 0 : i32
    return %c0_i32, %c0_i32_0 : i32, i32
  }
  func.func @transform_4(%arg0: i32) -> i32 {
    %c0_i32 = arith.constant 0 : i32
    %c0_i32_0 = arith.constant 0 : i32
    return %c0_i32 : i32
  }
  func.func @transform_5(%arg0: i32) -> (i32, i32) {
    %c0_i32 = arith.constant 0 : i32
    %c0_i32_0 = arith.constant 0 : i32
    return %arg0, %c0_i32 : i32, i32
  }
}

</mosaic_0001>

<llo_original>
// kernel: tpu_custom_call.1
$region0: #{tpu_custom_call.1}
  #allocation0 [shape = 'u32[]', space=smem, size = 0x4, offset = 0x4, fixed_abs, tag = 'smem constant byte address 0x4 - core index']
  #allocation1 [shape = 'u32[144,128]{1,0:T(1,128)}', space=vmem, size = 0x12000, scoped, tag = 'internal scratch']
  #allocation2 [shape = 'f32[1]{0:T(128)S(6)}', space=smem, size = 0x200, scoped, tag = 'scoped memory for tpu_custom_call.1']
  %s0 = inlined_call_operand.hbm [shape: bf16[16,16], index: 0, kind: input, shape index: {}]
  %s1 = inlined_call_operand.hbm [shape: bf16[16,128], index: 1, kind: input, shape index: {}]
  %s2 = inlined_call_operand.vmem [shape: f32[1,128], index: 2, kind: input, shape index: {}]
  %s3 = inlined_call_operand.vmem [shape: f32[1,128], index: 3, kind: input, shape index: {}]
  %s4 = inlined_call_operand.<no memory space> [shape: f32[1], index: 4, kind: input, shape index: {}]
  %s5 = inlined_call_operand.vmem [shape: f32[16,1], index: 5, kind: output, shape index: {}]
  %s6 = sld [smem:[#allocation0]]
  $region38: #{tpu_custom_call.1} parent=0
    _
  %s8 = ssub.s32 1, %s6
  %s9 = scalar_select 0, %s8, %s6
  %10 = sst [smem:[#allocation2]] %s4
  $region1: #{tpu_custom_call.1} parent=0
    #allocation3 [shape = 'u8[4096]{0}', space=vmem, size = 0x1000, scoped, tag = 'input window, operand 0, single buffered']
    #allocation4 [shape = 's32[1]{0}', space=sflag, size = 0x4, scoped, tag = 'scoped memory for tpu_custom_call.1']
    #allocation5 [shape = 'u8[4096]{0}', space=vmem, size = 0x1000, scoped, tag = 'input window, operand 1, single buffered']
    #allocation6 [shape = 's32[1]{0}', space=sflag, size = 0x4, scoped, tag = 'scoped memory for tpu_custom_call.1']
    %11 = vsyncpa [#allocation4], 0
    %12 = vsyncpa [#allocation6], 0
    // Predicated region
    $region2: #{tpu_custom_call.1} parent=1 // pred_check
      _
    $region3: #{tpu_custom_call.1} parent=1 // pred_check_branch
      %14 = sbr.rel (0) target = $region5
    $region4: #{tpu_custom_call.1} parent=1 // pred_region
      %s16 = ssub.s32 128, 128
      %17 = vsyncadd [#allocation4], %s16
      %s18 = sshll.u32 [#allocation3], 4
      %s19 = int_to_ptr.vmem [resolvable:$true] %s18
      %24 = dma.hbm_to_vmem [thread:$0]  %s0, 128, %s19, [#allocation4], 64, 64, 4
    $region5: #{tpu_custom_call.1} parent=1 // pred_fallthru
      _
    // Predicated region
    $region6: #{tpu_custom_call.1} parent=1 // pred_check
      _
    $region7: #{tpu_custom_call.1} parent=1 // pred_check_branch
      %26 = sbr.rel (0) target = $region9
    $region8: #{tpu_custom_call.1} parent=1 // pred_region
      %s28 = ssub.s32 128, 128
      %29 = vsyncadd [#allocation6], %s28
      %s30 = sshll.u32 [#allocation5], 4
      %s31 = int_to_ptr.vmem [resolvable:$true] %s30
      %36 = dma.hbm_to_vmem [thread:$0]  %s1, 128, %s31, [#allocation6], 64, 64, 4
    $region9: #{tpu_custom_call.1} parent=1 // pred_fallthru
      _
    // Predicated region
    $region10: #{tpu_custom_call.1} parent=1 // pred_check
      _
    $region11: #{tpu_custom_call.1} parent=1 // pred_check_branch
      %38 = sbr.rel (0) target = $region13
    $region12: #{tpu_custom_call.1} parent=1 // pred_region
      _
    $region13: #{tpu_custom_call.1} parent=1 // pred_fallthru
      _
    // Predicated region
    $region14: #{tpu_custom_call.1} parent=1 // pred_check
      _
    $region15: #{tpu_custom_call.1} parent=1 // pred_check_branch
      %40 = sbr.rel (0) target = $region17
    $region16: #{tpu_custom_call.1} parent=1 // pred_region
      _
    $region17: #{tpu_custom_call.1} parent=1 // pred_fallthru
      _
    // Predicated region
    $region18: #{tpu_custom_call.1} parent=1 // pred_check
      _
    $region19: #{tpu_custom_call.1} parent=1 // pred_check_branch
      %42 = sbr.rel (0) target = $region21
    $region20: #{tpu_custom_call.1} parent=1 // pred_region
      _
    $region21: #{tpu_custom_call.1} parent=1 // pred_fallthru
      _
    // Predicated region
    $region22: #{tpu_custom_call.1} parent=1 // pred_check
      _
    $region23: #{tpu_custom_call.1} parent=1 // pred_check_branch
      %44 = sbr.rel (0) target = $region25
    $region24: #{tpu_custom_call.1} parent=1 // pred_region
      %45 = dma.done [#allocation4], 128
    $region25: #{tpu_custom_call.1} parent=1 // pred_fallthru
      _
    // Predicated region
    $region26: #{tpu_custom_call.1} parent=1 // pred_check
      _
    $region27: #{tpu_custom_call.1} parent=1 // pred_check_branch
      %47 = sbr.rel (0) target = $region29
    $region28: #{tpu_custom_call.1} parent=1 // pred_region
      %48 = dma.done [#allocation6], 128
    $region29: #{tpu_custom_call.1} parent=1 // pred_fallthru
      _
    %v50 = vld [vmem:[#allocation3] sm:$0xf]
    %v51 = vld [vmem:[#allocation3 + $0x4] sm:$0xf]
    %v52 = vld [vmem:[#allocation5] sm:$0xf]
    %v53 = vld [vmem:[#allocation5 + $0x4] sm:$0xf]
    %v54 = vld [vmem:[%s2] sm:$0x1]
    %v56 = vlaneseq
    %v57 = vshrl.u32 %v56, 7
    %v58 = vsub.s32 0, %v57
    %v59 = vrot.slane %v54, %v58
    %v63 = vunpack.c.l.b16 %v50
    %v64 = vunpack.c.l.b16 %v51
    %v65 = vpack.c.b16 %v64, %v63
    %v68 = vunpack.c.l.b16 %v52
    %v69 = vunpack.c.l.b16 %v53
    %v70 = vpack.c.b16 %v69, %v68
    %vm72 = vcmask 130048
    %v74 = vsel %vm72, %v65, 0
    %76 = vmatprep.subr.bf16.mxu0 0
    %77 = vmatpush1.bf16.msra.mxu0 %v70
    %78 = vmatprep.subr.bf16.mxu0 0
    %79 = vmatpush1.bf16.msra.mxu0 0
    %80 = vmatprep.subr.bf16.mxu0 0
    %81 = vmatpush1.bf16.msra.mxu0 0
    %82 = vmatprep.subr.bf16.mxu0 0
    %83 = vmatpush1.bf16.msra.mxu0 0
    %84 = vmatprep.subr.bf16.mxu0 0
    %85 = vmatpush1.bf16.msra.mxu0 0
    %86 = vmatprep.subr.bf16.mxu0 0
    %87 = vmatpush1.bf16.msra.mxu0 0
    %88 = vmatprep.subr.bf16.mxu0 0
    %89 = vmatpush1.bf16.msra.mxu0 0
    %90 = vmatprep.subr.bf16.mxu0 0
    %91 = vmatpush1.bf16.msra.mxu0 0
    %92 = vmatprep.subr.bf16.mxu0 0
    %93 = vmatpush1.bf16.msra.mxu0 0
    %94 = vmatprep.subr.bf16.mxu0 0
    %95 = vmatpush1.bf16.msra.mxu0 0
    %96 = vmatprep.subr.bf16.mxu0 0
    %97 = vmatpush1.bf16.msra.mxu0 0
    %98 = vmatprep.subr.bf16.mxu0 0
    %99 = vmatpush1.bf16.msra.mxu0 0
    %100 = vmatprep.subr.bf16.mxu0 0
    %101 = vmatpush1.bf16.msra.mxu0 0
    %102 = vmatprep.subr.bf16.mxu0 0
    %103 = vmatpush1.bf16.msra.mxu0 0
    %104 = vmatprep.subr.bf16.mxu0 0
    %105 = vmatpush1.bf16.msra.mxu0 0
    %106 = vmatprep.subr.bf16.mxu0 0
    %107 = vmatpush1.bf16.msra.mxu0 0
    %108 = vmatprep.mubr.bf16.mxu0 0
    %109 = vmatmul.mubr.bf16.gmra.mrb[0].mxu0 %v74
    %v110 = vpop.f32.mrb[0].mxu0
    %v111 = vadd.f32 %v59, %v110
    %v112 = vpop.f32.mrb[0].mxu0
    %v113 = vpop.f32.mrb[0].mxu0
    %v114 = vadd.f32 %v59, %v113
    %v115 = vpop.f32.mrb[0].mxu0
    %116 = vdwg.mxu0
    %v117 = vmax.f32 %v111, 0.0
    %v118 = vmax.f32 %v114, 0.0
    %v119 = vld [vmem:[%s3] sm:$0x1]
    %v121 = vlaneseq
    %v122 = vshrl.u32 %v121, 7
    %v123 = vsub.s32 0, %v122
    %v124 = vrot.slane %v119, %v123
    %v126 = vmul.f32 %v117, %v124
    %v127 = vmul.f32 %v118, %v124
    %128 = vadd.xlane.f32.xlu0 %v126
    %v129 = vpop.xlane.xlu0 %128
    %130 = vadd.xlane.f32.xlu0 %v127
    %v131 = vpop.xlane.xlu0 %130
    %s132 = sld [smem:[#allocation2]]
    %v133 = vstv %s132
    %v134 = vadd.f32 %v129, %v133
    %v135 = vadd.f32 %v131, %v133
    %v136 = vxor.u32 %v134, 2147483648
    %v137 = vxor.u32 %v135, 2147483648
    %v138 = vmul.f32 %v136, 1.442695
    %v139 = vpow.pop %v138
    %v140 = vmul.f32 %v137, 1.442695
    %v141 = vpow.pop %v140
    %v142 = vadd.f32 %v139, 1.0
    %v143 = vadd.f32 %v141, 1.0
    %v144 = vrcp.pop %v142
    %v145 = vmul.f32 1.0, %v144
    %v146 = vrcp.pop %v143
    %v147 = vmul.f32 1.0, %v146
    %vm148 = vcmask 7168
    %149 = vst.msk [vmem:[%s5] sm:$0xff] %vm148, %v145
    %150 = vst.msk [vmem:[%s5 + $0x8] sm:$0xff] %vm148, %v147
    // Predicated region
    $region30: #{tpu_custom_call.1} parent=1 // pred_check
      _
    $region31: #{tpu_custom_call.1} parent=1 // pred_check_branch
      %152 = sbr.rel (0) target = $region33
    $region32: #{tpu_custom_call.1} parent=1 // pred_region
      _
    $region33: #{tpu_custom_call.1} parent=1 // pred_fallthru
      _
    // Predicated region
    $region34: #{tpu_custom_call.1} parent=1 // pred_check
      _
    $region35: #{tpu_custom_call.1} parent=1 // pred_check_branch
      %154 = sbr.rel (0) target = $region37
    $region36: #{tpu_custom_call.1} parent=1 // pred_region
      _
    $region37: #{tpu_custom_call.1} parent=1 // pred_fallthru
      _
    %155 = vsyncpa [#allocation4], 1
    %156 = vsyncpa [#allocation6], 1

</llo_original>
